<compile_context>
chip_gen: v7x
topology: tpu7x:2x2x1
jax: 0.10.0
libtpu: 0.0.40
codegen_flags: <defaults>
</compile_context>

<pallas_src>
import jax
import jax.numpy as jnp
from jax.experimental import pallas as pl
from jax.experimental.pallas import tpu as pltpu


# ----------------------------------------------------------------------------
# Pallas kernel: full attention forward for one batch tile.
# ----------------------------------------------------------------------------
def _attention_kernel(enc_ref, w_ref, h_ref, out_ref):
    enc = enc_ref[...]                                             # (TB, S, D) native dtype

    # Hoist: score[b, s] = (enc[b, s] @ W^T) . h[b] == enc[b, s] . (h[b] @ W)
    hw = jnp.dot(h_ref[...], w_ref[...],
                 preferred_element_type=jnp.float32)               # (TB, D)  f32 acc, MXU
    hw3 = hw.astype(enc.dtype)[:, None, :]                         # (TB, 1, D)

    # score[b, 1, s] = hw[b] . enc[b, s]      (batched matmul, q == 1, MXU)
    score = jnp.einsum("bqd,bkd->bqk", hw3, enc,
                       preferred_element_type=jnp.float32)         # (TB, 1, S) f32

    # Softmax over the sequence axis (== dim=1 of the PyTorch (B, S, 1) score).
    m = jnp.max(score, axis=-1, keepdims=True)                     # XLU
    e = jnp.exp(score - m)                                         # EUP
    denom = jnp.sum(e, axis=-1, keepdims=True)
    alpha = e * pl.reciprocal(denom, approx=False)                 # exact: keeps 1e-4 tol

    # attention[b, 1, :] = sum_s alpha[b, s] * enc[b, s, :]        (batched matmul, MXU)
    attn = jnp.einsum("bqk,bkd->bqd", alpha.astype(enc.dtype), enc,
                      preferred_element_type=jnp.float32)          # (TB, 1, D) f32
    out_ref[...] = attn.astype(out_ref.dtype)


# ----------------------------------------------------------------------------
# Batch-tile heuristic: sublane-aligned, VMEM-budgeted, prefers >= 2 grid steps.
# ----------------------------------------------------------------------------
def _default_block_b(B, S, D, itemsize, budget_bytes=8 << 20):
    """Largest batch tile whose double-buffered enc block fits `budget_bytes`,
    aligned to the dtype's sublane packing (8 rows f32, 16 rows bf16), and
    preferring >= 2 grid steps so the enc DMA overlaps compute and v7x can
    shard the batch over both TensorCores."""
    sub = 8 * max(1, 4 // itemsize)
    rows = budget_bytes // max(1, 2 * S * D * itemsize)
    rows = min(rows, B)
    cands = [b for b in range(sub, rows + 1, sub) if B % b == 0]
    if not cands:
        return B                       # tiny / awkward batch: one tile of the whole batch
    multi = [b for b in cands if b <= B // 2]
    return max(multi) if multi else max(cands)


# ----------------------------------------------------------------------------
# Wrapper: mirrors Attention.forward(encoder_outputs, decoder_hidden).
# ----------------------------------------------------------------------------
def attention_pallas(encoder_outputs, decoder_hidden, W, *,
                     block_b=None, vmem_limit_bytes=32 * 1024 * 1024):
    """Pallas TPU implementation of Attention.forward.

    encoder_outputs : (B, S, 2H)   -- any float dtype; streamed as-is (bf16 stays bf16)
    decoder_hidden  : (n_layers, B, 2H) -- layer 0 is used, as in the module
    W               : (2H, 2H)     -- nn.Linear weight (out, in), no bias
    returns         : (B, 1, 2H)   -- dtype matches encoder_outputs
    """
    enc = jnp.asarray(encoder_outputs)
    h0 = jnp.asarray(decoder_hidden)[0]                            # (B, D)
    w = jnp.asarray(W)

    B, S, D = enc.shape
    if block_b is None:
        block_b = _default_block_b(B, S, D, enc.dtype.itemsize)
    assert B % block_b == 0, (B, block_b)
    # The hidden-state block (block_b, D) needs sublane-aligned rows unless it
    # spans the whole batch.
    assert block_b == B or block_b % 8 == 0, (B, block_b)

    grid_spec = pltpu.PrefetchScalarGridSpec(
        num_scalar_prefetch=0,
        grid=(B // block_b,),
        in_specs=[
            pl.BlockSpec((block_b, S, D), lambda b: (b, 0, 0)),    # enc tile (streamed)
            pl.BlockSpec((D, D), lambda b: (0, 0)),                # W (grid-invariant; DMA'd once)
            pl.BlockSpec((block_b, D), lambda b: (b, 0)),          # decoder-hidden tile
        ],
        out_specs=pl.BlockSpec((block_b, 1, D), lambda b: (b, 0, 0)),
    )

    return pl.pallas_call(
        _attention_kernel,
        out_shape=jax.ShapeDtypeStruct((B, 1, D), enc.dtype),
        grid_spec=grid_spec,
        compiler_params=pltpu.CompilerParams(
            dimension_semantics=("parallel",),       # batch tiles are independent
            vmem_limit_bytes=vmem_limit_bytes,       # explicit: v5e default is only 16 MiB
        ),
    )(enc, w, h0)


# ----------------------------------------------------------------------------
# Pure-JAX f32 reference in the exact PyTorch op order (correctness check).
# ----------------------------------------------------------------------------
def attention_ref(encoder_outputs, decoder_hidden, W):
    enc = jnp.asarray(encoder_outputs, jnp.float32)
    h0 = jnp.asarray(decoder_hidden, jnp.float32)[0]
    w = jnp.asarray(W, jnp.float32)
    weights = enc @ w.T                                            # (B, S, D)
    score = jnp.einsum("bsd,bd->bs", weights, h0)                  # (B, S)
    alpha = jax.nn.softmax(score, axis=1)                          # softmax over S
    attn = jnp.einsum("bs,bsd->bd", alpha, enc)                    # (B, D)
    return attn[:, None, :]                                        # (B, 1, D)


if __name__ == "__main__":
    # --- 1) Small module-consistent shapes, f32, strict tolerance -----------
    HID_DIM = 32
    D = 2 * HID_DIM          # bidirectional encoder -> features = 2 * hid_dim
    BATCH = 2
    SEQ = 8
    N_LAYERS = 2             # decoder_hidden: (n_layers, B, 2H); [0] is used

    key = jax.random.PRNGKey(0)
    k_enc, k_hid, k_w = jax.random.split(key, 3)
    encoder_outputs = jax.random.normal(k_enc, (BATCH, SEQ, D), jnp.float32)
    decoder_hidden = jax.random.normal(k_hid, (N_LAYERS, BATCH, D), jnp.float32)
    scale = 1.0 / jnp.sqrt(D)
    W = jax.random.uniform(k_w, (D, D), jnp.float32, minval=-scale, maxval=scale)

    out = jax.block_until_ready(jax.jit(attention_pallas)(encoder_outputs, decoder_hidden, W))
    assert out.shape == (BATCH, 1, D), out.shape
    assert out.dtype == jnp.float32, out.dtype
    ref = attention_ref(encoder_outputs, decoder_hidden, W)
    max_err = float(jnp.max(jnp.abs(out - ref)))
    assert jnp.allclose(out, ref, atol=1e-4, rtol=1e-4), f"f32 mismatch, max_err={max_err}"

    # --- 2) bf16, multi-step grid (block_b=16 -> grid=(2,)) smoke check ------
    # Exercises native-bf16 DMA/MXU path, f32 softmax, and the pipelined grid.
    B2, S2, D2 = 32, 16, 128
    k1, k2, k3 = jax.random.split(jax.random.PRNGKey(1), 3)
    enc2 = jax.random.normal(k1, (B2, S2, D2), jnp.float32).astype(jnp.bfloat16)
    hid2 = jax.random.normal(k2, (N_LAYERS, B2, D2), jnp.float32).astype(jnp.bfloat16)
    W2 = (jax.random.uniform(k3, (D2, D2), jnp.float32, minval=-1.0, maxval=1.0)
          / D2).astype(jnp.bfloat16)
    out2 = jax.block_until_ready(jax.jit(attention_pallas)(enc2, hid2, W2))
    assert out2.shape == (B2, 1, D2), out2.shape
    assert out2.dtype == jnp.bfloat16, out2.dtype
    ref2 = attention_ref(enc2, hid2, W2)
    max_err2 = float(jnp.max(jnp.abs(out2.astype(jnp.float32) - ref2)))
    assert jnp.allclose(out2.astype(jnp.float32), ref2, atol=3e-2, rtol=3e-2), \
        f"bf16 mismatch, max_err={max_err2}"

    print("KERNEL_OK")
</pallas_src>

<mosaic_0001>
module attributes {stable_mosaic.version = 11 : i64} {
  func.func @_attention_kernel(%arg0: i32, %arg1: memref<2x8x64xf32, #tpu.memory_space<vmem>>, %arg2: memref<64x64xf32, #tpu.memory_space<vmem>>, %arg3: memref<2x64xf32, #tpu.memory_space<vmem>>, %arg4: memref<2x1x64xf32, #tpu.memory_space<vmem>>) attributes {dimension_semantics = [#tpu.dimension_semantics<parallel>], iteration_bounds = array<i64: 1>, scalar_prefetch = 0 : i64, scratch_operands = 0 : i64, tpu.core_type = #tpu.core_type<tc>, window_params = [{transform_indices = @transform_0, window_bounds = array<i64: 2, 8, 64>}, {pipeline_mode = #tpu.pipeline_mode<synchronous>, transform_indices = @transform_1, window_bounds = array<i64: 64, 64>}, {transform_indices = @transform_2, window_bounds = array<i64: 2, 64>}, {transform_indices = @transform_3, window_bounds = array<i64: 2, 1, 64>}]} {
    %c0 = arith.constant 0 : index
    %c0_0 = arith.constant 0 : index
    %c0_1 = arith.constant 0 : index
    %0 = vector.load %arg1[%c0, %c0_0, %c0_1] : memref<2x8x64xf32, #tpu.memory_space<vmem>>, vector<2x8x64xf32>
    %c0_2 = arith.constant 0 : index
    %c0_3 = arith.constant 0 : index
    %1 = vector.load %arg3[%c0_2, %c0_3] : memref<2x64xf32, #tpu.memory_space<vmem>>, vector<2x64xf32>
    %c0_4 = arith.constant 0 : index
    %c0_5 = arith.constant 0 : index
    %2 = vector.load %arg2[%c0_4, %c0_5] : memref<64x64xf32, #tpu.memory_space<vmem>>, vector<64x64xf32>
    %cst = arith.constant dense<0.000000e+00> : vector<2x64xf32>
    %3 = tpu.matmul %1, %2, %cst {dimension_numbers = #tpu.dot_dimension_numbers<[1], [0], [0], [1], [0, 0, 1, 1], [], []>} : vector<2x64xf32>, vector<64x64xf32>, vector<2x64xf32> -> vector<2x64xf32>
    %4 = vector.shape_cast %3 : vector<2x64xf32> to vector<2x1x64xf32>
    "tpu.trace_start"() <{level = 10 : i32, message = "bqd,bkd->bqk"}> : () -> ()
    %cst_6 = arith.constant dense<0.000000e+00> : vector<2x1x8xf32>
    %5 = tpu.matmul %4, %0, %cst_6 {dimension_numbers = #tpu.dot_dimension_numbers<[2], [2], [1], [1], [0, 0, 0, 1, 1, 1], [0], [0]>} : vector<2x1x64xf32>, vector<2x8x64xf32>, vector<2x1x8xf32> -> vector<2x1x8xf32>
    "tpu.trace_stop"() : () -> ()
    %cst_7 = arith.constant dense<0xFF800000> : vector<2x1xf32>
    %6 = vector.multi_reduction <maximumf>, %5, %cst_7 [2] : vector<2x1x8xf32> to vector<2x1xf32>
    %7 = vector.shape_cast %6 : vector<2x1xf32> to vector<2x1x1xf32>
    %8 = vector.broadcast %7 : vector<2x1x1xf32> to vector<2x1x8xf32>
    %9 = arith.subf %5, %8 : vector<2x1x8xf32>
    %10 = math.exp %9 : vector<2x1x8xf32>
    %cst_8 = arith.constant dense<0.000000e+00> : vector<2x1xf32>
    %11 = vector.multi_reduction <add>, %10, %cst_8 [2] : vector<2x1x8xf32> to vector<2x1xf32>
    %12 = vector.shape_cast %11 : vector<2x1xf32> to vector<2x1x1xf32>
    %13 = tpu.reciprocal %12 : vector<2x1x1xf32> -> vector<2x1x1xf32>
    %14 = vector.broadcast %13 : vector<2x1x1xf32> to vector<2x1x8xf32>
    %15 = arith.mulf %10, %14 : vector<2x1x8xf32>
    "tpu.trace_start"() <{level = 10 : i32, message = "bqk,bkd->bqd"}> : () -> ()
    %cst_9 = arith.constant dense<0.000000e+00> : vector<2x1x64xf32>
    %16 = tpu.matmul %15, %0, %cst_9 {dimension_numbers = #tpu.dot_dimension_numbers<[2], [1], [1], [2], [0, 0, 0, 1, 1, 2], [0], [0]>} : vector<2x1x8xf32>, vector<2x8x64xf32>, vector<2x1x64xf32> -> vector<2x1x64xf32>
    "tpu.trace_stop"() : () -> ()
    %c0_10 = arith.constant 0 : index
    %c0_11 = arith.constant 0 : index
    %c0_12 = arith.constant 0 : index
    %17 = vector.load %arg4[%c0_10, %c0_11, %c0_12] : memref<2x1x64xf32, #tpu.memory_space<vmem>>, vector<2x1x64xf32>
    tpu.vector_store %arg4[%c0_10, %c0_11, %c0_12], %16 {strides = array<i32>} : memref<2x1x64xf32, #tpu.memory_space<vmem>>, vector<2x1x64xf32>,
    return
  }
  func.func @transform_0(%arg0: i32) -> (i32, i32, i32) {
    %c0_i32 = arith.constant 0 : i32
    %c0_i32_0 = arith.constant 0 : i32
    %c0_i32_1 = arith.constant 0 : i32
    return %arg0, %c0_i32, %c0_i32_0 : i32, i32, i32
  }
  func.func @transform_1(%arg0: i32) -> (i32, i32) {
    %c0_i32 = arith.constant 0 : i32
    %c0_i32_0 = arith.constant 0 : i32
    %c0_i32_1 = arith.constant 0 : i32
    return %c0_i32, %c0_i32_0 : i32, i32
  }
  func.func @transform_2(%arg0: i32) -> (i32, i32) {
    %c0_i32 = arith.constant 0 : i32
    %c0_i32_0 = arith.constant 0 : i32
    return %arg0, %c0_i32 : i32, i32
  }
  func.func @transform_3(%arg0: i32) -> (i32, i32, i32) {
    %c0_i32 = arith.constant 0 : i32
    %c0_i32_0 = arith.constant 0 : i32
    %c0_i32_1 = arith.constant 0 : i32
    return %arg0, %c0_i32, %c0_i32_0 : i32, i32, i32
  }
}

</mosaic_0001>

<llo_original>
// kernel: attention_pallas.1
$region0: #{attention_pallas.1}
  #allocation0 [shape = 'u32[]', space=smem, size = 0x4, offset = 0x4, fixed_abs, tag = 'smem constant byte address 0x4 - core index']
  #allocation1 [shape = 'u32[144,128]{1,0:T(1,128)}', space=vmem, size = 0x12000, scoped, tag = 'internal scratch']
  %s0 = inlined_call_operand.hbm [shape: f32[2,8,64], index: 0, kind: input, shape index: {}]
  %s1 = inlined_call_operand.hbm [shape: f32[64,64], index: 1, kind: input, shape index: {}]
  %s2 = inlined_call_operand.vmem [shape: f32[2,64], index: 2, kind: input, shape index: {}]
  %s3 = inlined_call_operand.hbm [shape: f32[2,1,64], index: 3, kind: output, shape index: {}]
  %s4 = sld [smem:[#allocation0]]
  $region30: #{attention_pallas.1} parent=0
    _
  %s6 = ssub.s32 1, %s4
  %s7 = scalar_select 0, %s6, %s4
  $region1: #{attention_pallas.1} parent=0
    #allocation2 [shape = 'u8[8192]{0}', space=vmem, size = 0x2000, scoped, tag = 'input window, operand 0, single buffered']
    #allocation3 [shape = 's32[1]{0}', space=sflag, size = 0x4, scoped, tag = 'scoped memory for attention_pallas.1']
    #allocation4 [shape = 's32[1]{0}', space=sflag, size = 0x4, scoped, tag = 'scoped memory for attention_pallas.1']
    #allocation5 [shape = 'u8[32768]{0}', space=vmem, size = 0x8000, scoped, tag = 'input window, operand 1, single buffered']
    #allocation6 [shape = 's32[1]{0}', space=sflag, size = 0x4, scoped, tag = 'scoped memory for attention_pallas.1']
    #allocation7 [shape = 'u8[1024]{0}', space=vmem, size = 0x400, scoped, tag = 'output window, operand 0, single buffered']
    %8 = vsyncpa [#allocation3], 0
    %9 = vsyncpa [#allocation6], 0
    %10 = vsyncpa [#allocation4], 0
    // Predicated region
    $region2: #{attention_pallas.1} parent=1 // pred_check
      _
    $region3: #{attention_pallas.1} parent=1 // pred_check_branch
      %12 = sbr.rel (0) target = $region5
    $region4: #{attention_pallas.1} parent=1 // pred_region
      %s14 = ssub.s32 256, 256
      %15 = vsyncadd [#allocation3], %s14
      %s16 = sshll.u32 [#allocation2], 4
      %s17 = int_to_ptr.vmem [resolvable:$true] %s16
      %22 = dma.hbm_to_vmem [thread:$0]  %s0, 256, %s17, [#allocation3], 128, 128, 8
    $region5: #{attention_pallas.1} parent=1 // pred_fallthru
      _
    // Predicated region
    $region6: #{attention_pallas.1} parent=1 // pred_check
      _
    $region7: #{attention_pallas.1} parent=1 // pred_check_branch
      %24 = sbr.rel (0) target = $region9
    $region8: #{attention_pallas.1} parent=1 // pred_region
      %s26 = ssub.s32 1024, 1024
      %27 = vsyncadd [#allocation6], %s26
      %s28 = sshll.u32 [#allocation5], 4
      %s29 = int_to_ptr.vmem [resolvable:$true] %s28
      %34 = dma.hbm_to_vmem [thread:$0]  %s1, 1024, %s29, [#allocation6], 128, 128, 8
    $region9: #{attention_pallas.1} parent=1 // pred_fallthru
      _
    // Predicated region
    $region10: #{attention_pallas.1} parent=1 // pred_check
      _
    $region11: #{attention_pallas.1} parent=1 // pred_check_branch
      %36 = sbr.rel (0) target = $region13
    $region12: #{attention_pallas.1} parent=1 // pred_region
      _
    $region13: #{attention_pallas.1} parent=1 // pred_fallthru
      _
    // Predicated region
    $region14: #{attention_pallas.1} parent=1 // pred_check
      _
    $region15: #{attention_pallas.1} parent=1 // pred_check_branch
      %38 = sbr.rel (0) target = $region17
    $region16: #{attention_pallas.1} parent=1 // pred_region
      %39 = dma.done [#allocation3], 256
    $region17: #{attention_pallas.1} parent=1 // pred_fallthru
      _
    // Predicated region
    $region18: #{attention_pallas.1} parent=1 // pred_check
      _
    $region19: #{attention_pallas.1} parent=1 // pred_check_branch
      %41 = sbr.rel (0) target = $region21
    $region20: #{attention_pallas.1} parent=1 // pred_region
      %42 = dma.done [#allocation6], 1024
    $region21: #{attention_pallas.1} parent=1 // pred_fallthru
      _
    %v43 = vld [vmem:[#allocation2] sm:$0xff]
    %v44 = vld [vmem:[#allocation2 + $0x8] sm:$0xff]
    %v45 = vld [vmem:[%s2] sm:$0x3]
    %v46 = vld [vmem:[#allocation5] sm:$0xff]
    %v47 = vld [vmem:[#allocation5 + $0x8] sm:$0xff]
    %v48 = vld [vmem:[#allocation5 + $0x10] sm:$0xff]
    %v49 = vld [vmem:[#allocation5 + $0x18] sm:$0xff]
    %v50 = vld [vmem:[#allocation5 + $0x20] sm:$0xff]
    %v51 = vld [vmem:[#allocation5 + $0x28] sm:$0xff]
    %v52 = vld [vmem:[#allocation5 + $0x30] sm:$0xff]
    %v53 = vld [vmem:[#allocation5 + $0x38] sm:$0xff]
    %vm54 = vcmask 523264
    %v56 = vsel %vm54, %v45, 0
    %58 = vmatprep.subr.mxu0 0.0
    %59 = vmatpush1.msra.mxu0 %v46
    %60 = vmatprep.subr.mxu0 0.0
    %61 = vmatpush1.msra.mxu0 %v47
    %62 = vmatprep.subr.mxu0 0.0
    %63 = vmatpush1.msra.mxu0 %v48
    %64 = vmatprep.subr.mxu0 0.0
    %65 = vmatpush1.msra.mxu0 %v49
    %66 = vmatprep.subr.mxu0 0.0
    %67 = vmatpush1.msra.mxu0 %v50
    %68 = vmatprep.subr.mxu0 0.0
    %69 = vmatpush1.msra.mxu0 %v51
    %70 = vmatprep.subr.mxu0 0.0
    %71 = vmatpush1.msra.mxu0 %v52
    %72 = vmatprep.subr.mxu0 0.0
    %73 = vmatpush1.msra.mxu0 %v53
    %74 = vmatprep.subr.mxu0 0.0
    %75 = vmatpush1.msra.mxu0 0.0
    %76 = vmatprep.subr.mxu0 0.0
    %77 = vmatpush1.msra.mxu0 0.0
    %78 = vmatprep.subr.mxu0 0.0
    %79 = vmatpush1.msra.mxu0 0.0
    %80 = vmatprep.subr.mxu0 0.0
    %81 = vmatpush1.msra.mxu0 0.0
    %82 = vmatprep.subr.mxu0 0.0
    %83 = vmatpush1.msra.mxu0 0.0
    %84 = vmatprep.subr.mxu0 0.0
    %85 = vmatpush1.msra.mxu0 0.0
    %86 = vmatprep.subr.mxu0 0.0
    %87 = vmatpush1.msra.mxu0 0.0
    %88 = vmatprep.subr.mxu0 0.0
    %89 = vmatpush1.msra.mxu0 0.0
    %90 = vmatprep.subr.mxu0 0.0
    %91 = vmatpush1.msra.mxu0 0.0
    %92 = vmatprep.subr.mxu0 0.0
    %93 = vmatpush1.msra.mxu0 0.0
    %94 = vmatprep.subr.mxu0 0.0
    %95 = vmatpush1.msra.mxu0 0.0
    %96 = vmatprep.subr.mxu0 0.0
    %97 = vmatpush1.msra.mxu0 0.0
    %98 = vmatprep.subr.mxu0 0.0
    %99 = vmatpush1.msra.mxu0 0.0
    %100 = vmatprep.subr.mxu0 0.0
    %101 = vmatpush1.msra.mxu0 0.0
    %102 = vmatprep.subr.mxu0 0.0
    %103 = vmatpush1.msra.mxu0 0.0
    %104 = vmatprep.subr.mxu0 0.0
    %105 = vmatpush1.msra.mxu0 0.0
    %106 = vmatprep.subr.mxu0 0.0
    %107 = vmatpush1.msra.mxu0 0.0
    %108 = vmatprep.subr.mxu0 0.0
    %109 = vmatpush1.msra.mxu0 0.0
    %110 = vmatprep.subr.mxu0 0.0
    %111 = vmatpush1.msra.mxu0 0.0
    %112 = vmatprep.subr.mxu0 0.0
    %113 = vmatpush1.msra.mxu0 0.0
    %114 = vmatprep.subr.mxu0 0.0
    %115 = vmatpush1.msra.mxu0 0.0
    %116 = vmatprep.subr.mxu0 0.0
    %117 = vmatpush1.msra.mxu0 0.0
    %118 = vmatprep.subr.mxu0 0.0
    %119 = vmatpush1.msra.mxu0 0.0
    %120 = vmatprep.subr.mxu0 0.0
    %121 = vmatpush1.msra.mxu0 0.0
    %122 = vmatprep.mubr.f32.mxu0 0.0
    %123 = vmatmul.mubr.f32.gmra.mrb[0].mxu0 %v56
    %v124 = vpop.f32.mrb[0].mxu0
    %v125 = vadd.f32 0.0, %v124
    %v126 = vpop.f32.mrb[0].mxu0
    %127 = vdwg.mxu0
    %v130 = vunpack.c.l.s4 1966171168
    %v131 = vunpack.c.0.s8 %v130
    %v132 = vlaneseq
    %v133 = vshrl.u32 %v132, 7
    %v134 = vsub.s32 %v131, %v133
    %v135 = vrot.slane %v125, %v134
    %v136 = vcombine.high %v135, %v135
    %v138 = vunpack.c.l.s4 1966171168
    %v139 = vunpack.c.0.s8 %v138
    %v140 = vlaneseq
    %v141 = vshrl.u32 %v140, 7
    %v142 = vsub.s32 %v139, %v141
    %v143 = vrot.slane %v135, %v142
    %v145 = vunpack.c.l.s4 1966171168
    %v146 = vunpack.c.0.s8 %v145
    %v147 = vlaneseq
    %v148 = vshrl.u32 %v147, 7
    %v149 = vsub.s32 %v146, %v148
    %v150 = vrot.slane %v136, %v149
    %v151 = vsel %vm54, %v143, 0
    %v154 = vsel %vm54, %v43, 0
    %156 = vmatprep.subr.mxu0 0.0
    %157 = vmatpush1.xpose.msra.mxu0 %v154
    %158 = vmatprep.subr.mxu0 0.0
    %159 = vmatpush1.xpose.msra.mxu0 0.0
    %160 = vmatprep.subr.mxu0 0.0
    %161 = vmatpush1.xpose.msra.mxu0 0.0
    %162 = vmatprep.subr.mxu0 0.0
    %163 = vmatpush1.xpose.msra.mxu0 0.0
    %164 = vmatprep.subr.mxu0 0.0
    %165 = vmatpush1.xpose.msra.mxu0 0.0
    %166 = vmatprep.subr.mxu0 0.0
    %167 = vmatpush1.xpose.msra.mxu0 0.0
    %168 = vmatprep.subr.mxu0 0.0
    %169 = vmatpush1.xpose.msra.mxu0 0.0
    %170 = vmatprep.subr.mxu0 0.0
    %171 = vmatpush1.xpose.msra.mxu0 0.0
    %172 = vmatprep.subr.mxu0 0.0
    %173 = vmatpush1.xpose.msra.mxu0 0.0
    %174 = vmatprep.subr.mxu0 0.0
    %175 = vmatpush1.xpose.msra.mxu0 0.0
    %176 = vmatprep.subr.mxu0 0.0
    %177 = vmatpush1.xpose.msra.mxu0 0.0
    %178 = vmatprep.subr.mxu0 0.0
    %179 = vmatpush1.xpose.msra.mxu0 0.0
    %180 = vmatprep.subr.mxu0 0.0
    %181 = vmatpush1.xpose.msra.mxu0 0.0
    %182 = vmatprep.subr.mxu0 0.0
    %183 = vmatpush1.xpose.msra.mxu0 0.0
    %184 = vmatprep.subr.mxu0 0.0
    %185 = vmatpush1.xpose.msra.mxu0 0.0
    %186 = vmatprep.subr.mxu0 0.0
    %187 = vmatpush1.xpose.msra.mxu0 0.0
    %188 = vmatprep.subr.mxu0 0.0
    %189 = vmatpush1.xpose.msra.mxu0 0.0
    %190 = vmatprep.subr.mxu0 0.0
    %191 = vmatpush1.xpose.msra.mxu0 0.0
    %192 = vmatprep.subr.mxu0 0.0
    %193 = vmatpush1.xpose.msra.mxu0 0.0
    %194 = vmatprep.subr.mxu0 0.0
    %195 = vmatpush1.xpose.msra.mxu0 0.0
    %196 = vmatprep.subr.mxu0 0.0
    %197 = vmatpush1.xpose.msra.mxu0 0.0
    %198 = vmatprep.subr.mxu0 0.0
    %199 = vmatpush1.xpose.msra.mxu0 0.0
    %200 = vmatprep.subr.mxu0 0.0
    %201 = vmatpush1.xpose.msra.mxu0 0.0
    %202 = vmatprep.subr.mxu0 0.0
    %203 = vmatpush1.xpose.msra.mxu0 0.0
    %204 = vmatprep.subr.mxu0 0.0
    %205 = vmatpush1.xpose.msra.mxu0 0.0
    %206 = vmatprep.subr.mxu0 0.0
    %207 = vmatpush1.xpose.msra.mxu0 0.0
    %208 = vmatprep.subr.mxu0 0.0
    %209 = vmatpush1.xpose.msra.mxu0 0.0
    %210 = vmatprep.subr.mxu0 0.0
    %211 = vmatpush1.xpose.msra.mxu0 0.0
    %212 = vmatprep.subr.mxu0 0.0
    %213 = vmatpush1.xpose.msra.mxu0 0.0
    %214 = vmatprep.subr.mxu0 0.0
    %215 = vmatpush1.xpose.msra.mxu0 0.0
    %216 = vmatprep.subr.mxu0 0.0
    %217 = vmatpush1.xpose.msra.mxu0 0.0
    %218 = vmatprep.subr.mxu0 0.0
    %219 = vmatpush1.xpose.msra.mxu0 0.0
    %220 = vmatprep.mubr.f32.mxu0 0.0
    %221 = vmatmul.mubr.f32.gmra.mrb[0].mxu0 %v151
    %v222 = vpop.f32.mrb[0].mxu0
    %v223 = vadd.f32 0.0, %v222
    %v224 = vpop.f32.mrb[0].mxu0
    %225 = vdwg.mxu0
    %v226 = vsel %vm54, %v150, 0
    %v229 = vsel %vm54, %v44, 0
    %231 = vmatprep.subr.mxu0 0.0
    %232 = vmatpush1.xpose.msra.mxu0 %v229
    %233 = vmatprep.subr.mxu0 0.0
    %234 = vmatpush1.xpose.msra.mxu0 0.0
    %235 = vmatprep.subr.mxu0 0.0
    %236 = vmatpush1.xpose.msra.mxu0 0.0
    %237 = vmatprep.subr.mxu0 0.0
    %238 = vmatpush1.xpose.msra.mxu0 0.0
    %239 = vmatprep.subr.mxu0 0.0
    %240 = vmatpush1.xpose.msra.mxu0 0.0
    %241 = vmatprep.subr.mxu0 0.0
    %242 = vmatpush1.xpose.msra.mxu0 0.0
    %243 = vmatprep.subr.mxu0 0.0
    %244 = vmatpush1.xpose.msra.mxu0 0.0
    %245 = vmatprep.subr.mxu0 0.0
    %246 = vmatpush1.xpose.msra.mxu0 0.0
    %247 = vmatprep.subr.mxu0 0.0
    %248 = vmatpush1.xpose.msra.mxu0 0.0
    %249 = vmatprep.subr.mxu0 0.0
    %250 = vmatpush1.xpose.msra.mxu0 0.0
    %251 = vmatprep.subr.mxu0 0.0
    %252 = vmatpush1.xpose.msra.mxu0 0.0
    %253 = vmatprep.subr.mxu0 0.0
    %254 = vmatpush1.xpose.msra.mxu0 0.0
    %255 = vmatprep.subr.mxu0 0.0
    %256 = vmatpush1.xpose.msra.mxu0 0.0
    %257 = vmatprep.subr.mxu0 0.0
    %258 = vmatpush1.xpose.msra.mxu0 0.0
    %259 = vmatprep.subr.mxu0 0.0
    %260 = vmatpush1.xpose.msra.mxu0 0.0
    %261 = vmatprep.subr.mxu0 0.0
    %262 = vmatpush1.xpose.msra.mxu0 0.0
    %263 = vmatprep.subr.mxu0 0.0
    %264 = vmatpush1.xpose.msra.mxu0 0.0
    %265 = vmatprep.subr.mxu0 0.0
    %266 = vmatpush1.xpose.msra.mxu0 0.0
    %267 = vmatprep.subr.mxu0 0.0
    %268 = vmatpush1.xpose.msra.mxu0 0.0
    %269 = vmatprep.subr.mxu0 0.0
    %270 = vmatpush1.xpose.msra.mxu0 0.0
    %271 = vmatprep.subr.mxu0 0.0
    %272 = vmatpush1.xpose.msra.mxu0 0.0
    %273 = vmatprep.subr.mxu0 0.0
    %274 = vmatpush1.xpose.msra.mxu0 0.0
    %275 = vmatprep.subr.mxu0 0.0
    %276 = vmatpush1.xpose.msra.mxu0 0.0
    %277 = vmatprep.subr.mxu0 0.0
    %278 = vmatpush1.xpose.msra.mxu0 0.0
    %279 = vmatprep.subr.mxu0 0.0
    %280 = vmatpush1.xpose.msra.mxu0 0.0
    %281 = vmatprep.subr.mxu0 0.0
    %282 = vmatpush1.xpose.msra.mxu0 0.0
    %283 = vmatprep.subr.mxu0 0.0
    %284 = vmatpush1.xpose.msra.mxu0 0.0
    %285 = vmatprep.subr.mxu0 0.0
    %286 = vmatpush1.xpose.msra.mxu0 0.0
    %287 = vmatprep.subr.mxu0 0.0
    %288 = vmatpush1.xpose.msra.mxu0 0.0
    %289 = vmatprep.subr.mxu0 0.0
    %290 = vmatpush1.xpose.msra.mxu0 0.0
    %291 = vmatprep.subr.mxu0 0.0
    %292 = vmatpush1.xpose.msra.mxu0 0.0
    %293 = vmatprep.subr.mxu0 0.0
    %294 = vmatpush1.xpose.msra.mxu0 0.0
    %295 = vmatprep.mubr.f32.mxu0 0.0
    %296 = vmatmul.mubr.f32.gmra.mrb[0].mxu0 %v226
    %v297 = vpop.f32.mrb[0].mxu0
    %v298 = vadd.f32 0.0, %v297
    %v299 = vpop.f32.mrb[0].mxu0
    %300 = vdwg.mxu0
    %vm301 = vcmask 57344
    %v302 = vsel %vm301, %v223, -inf
    %303 = vmax.xlane.f32.xlu0 %v302
    %v304 = vpop.xlane.xlu0 %303
    %v305 = vsel %vm301, %v298, -inf
    %306 = vmax.xlane.f32.xlu0 %v305
    %v307 = vpop.xlane.xlu0 %306
    %v308 = vsub.f32 %v223, %v304
    %v309 = vsub.f32 %v298, %v307
    %v310 = vmul.f32 %v308, 1.442695
    %v311 = vpow.pop %v310
    %v312 = vmul.f32 %v309, 1.442695
    %v313 = vpow.pop %v312
    %v314 = vsel %vm301, %v311, 0.0
    %315 = vadd.xlane.f32.xlu0 %v314
    %v316 = vpop.xlane.xlu0 %315
    %v317 = vsel %vm301, %v313, 0.0
    %318 = vadd.xlane.f32.xlu0 %v317
    %v319 = vpop.xlane.xlu0 %318
    %v320 = vrcp.pop %v316
    %v321 = vrcp.pop %v319
    %v322 = vmul.f32 %v311, %v320
    %v323 = vmul.f32 %v313, %v321
    %vm324 = vcmask 64512
    %v326 = vsel %vm324, %v322, 0
    %328 = vmatprep.subr.mxu0 0.0
    %329 = vmatpush1.msra.mxu0 %v43
    %330 = vmatprep.subr.mxu0 0.0
    %331 = vmatpush1.msra.mxu0 0.0
    %332 = vmatprep.subr.mxu0 0.0
    %333 = vmatpush1.msra.mxu0 0.0
    %334 = vmatprep.subr.mxu0 0.0
    %335 = vmatpush1.msra.mxu0 0.0
    %336 = vmatprep.subr.mxu0 0.0
    %337 = vmatpush1.msra.mxu0 0.0
    %338 = vmatprep.subr.mxu0 0.0
    %339 = vmatpush1.msra.mxu0 0.0
    %340 = vmatprep.subr.mxu0 0.0
    %341 = vmatpush1.msra.mxu0 0.0
    %342 = vmatprep.subr.mxu0 0.0
    %343 = vmatpush1.msra.mxu0 0.0
    %344 = vmatprep.subr.mxu0 0.0
    %345 = vmatpush1.msra.mxu0 0.0
    %346 = vmatprep.subr.mxu0 0.0
    %347 = vmatpush1.msra.mxu0 0.0
    %348 = vmatprep.subr.mxu0 0.0
    %349 = vmatpush1.msra.mxu0 0.0
    %350 = vmatprep.subr.mxu0 0.0
    %351 = vmatpush1.msra.mxu0 0.0
    %352 = vmatprep.subr.mxu0 0.0
    %353 = vmatpush1.msra.mxu0 0.0
    %354 = vmatprep.subr.mxu0 0.0
    %355 = vmatpush1.msra.mxu0 0.0
    %356 = vmatprep.subr.mxu0 0.0
    %357 = vmatpush1.msra.mxu0 0.0
    %358 = vmatprep.subr.mxu0 0.0
    %359 = vmatpush1.msra.mxu0 0.0
    %360 = vmatprep.subr.mxu0 0.0
    %361 = vmatpush1.msra.mxu0 0.0
    %362 = vmatprep.subr.mxu0 0.0
    %363 = vmatpush1.msra.mxu0 0.0
    %364 = vmatprep.subr.mxu0 0.0
    %365 = vmatpush1.msra.mxu0 0.0
    %366 = vmatprep.subr.mxu0 0.0
    %367 = vmatpush1.msra.mxu0 0.0
    %368 = vmatprep.subr.mxu0 0.0
    %369 = vmatpush1.msra.mxu0 0.0
    %370 = vmatprep.subr.mxu0 0.0
    %371 = vmatpush1.msra.mxu0 0.0
    %372 = vmatprep.subr.mxu0 0.0
    %373 = vmatpush1.msra.mxu0 0.0
    %374 = vmatprep.subr.mxu0 0.0
    %375 = vmatpush1.msra.mxu0 0.0
    %376 = vmatprep.subr.mxu0 0.0
    %377 = vmatpush1.msra.mxu0 0.0
    %378 = vmatprep.subr.mxu0 0.0
    %379 = vmatpush1.msra.mxu0 0.0
    %380 = vmatprep.subr.mxu0 0.0
    %381 = vmatpush1.msra.mxu0 0.0
    %382 = vmatprep.subr.mxu0 0.0
    %383 = vmatpush1.msra.mxu0 0.0
    %384 = vmatprep.subr.mxu0 0.0
    %385 = vmatpush1.msra.mxu0 0.0
    %386 = vmatprep.subr.mxu0 0.0
    %387 = vmatpush1.msra.mxu0 0.0
    %388 = vmatprep.subr.mxu0 0.0
    %389 = vmatpush1.msra.mxu0 0.0
    %390 = vmatprep.subr.mxu0 0.0
    %391 = vmatpush1.msra.mxu0 0.0
    %392 = vmatprep.mubr.f32.mxu0 0.0
    %393 = vmatmul.mubr.f32.gmra.mrb[0].mxu0 %v326
    %v394 = vpop.f32.mrb[0].mxu0
    %v395 = vadd.f32 0.0, %v394
    %v396 = vpop.f32.mrb[0].mxu0
    %397 = vdwg.mxu0
    %v399 = vsel %vm324, %v323, 0
    %401 = vmatprep.subr.mxu0 0.0
    %402 = vmatpush1.msra.mxu0 %v44
    %403 = vmatprep.subr.mxu0 0.0
    %404 = vmatpush1.msra.mxu0 0.0
    %405 = vmatprep.subr.mxu0 0.0
    %406 = vmatpush1.msra.mxu0 0.0
    %407 = vmatprep.subr.mxu0 0.0
    %408 = vmatpush1.msra.mxu0 0.0
    %409 = vmatprep.subr.mxu0 0.0
    %410 = vmatpush1.msra.mxu0 0.0
    %411 = vmatprep.subr.mxu0 0.0
    %412 = vmatpush1.msra.mxu0 0.0
    %413 = vmatprep.subr.mxu0 0.0
    %414 = vmatpush1.msra.mxu0 0.0
    %415 = vmatprep.subr.mxu0 0.0
    %416 = vmatpush1.msra.mxu0 0.0
    %417 = vmatprep.subr.mxu0 0.0
    %418 = vmatpush1.msra.mxu0 0.0
    %419 = vmatprep.subr.mxu0 0.0
    %420 = vmatpush1.msra.mxu0 0.0
    %421 = vmatprep.subr.mxu0 0.0
    %422 = vmatpush1.msra.mxu0 0.0
    %423 = vmatprep.subr.mxu0 0.0
    %424 = vmatpush1.msra.mxu0 0.0
    %425 = vmatprep.subr.mxu0 0.0
    %426 = vmatpush1.msra.mxu0 0.0
    %427 = vmatprep.subr.mxu0 0.0
    %428 = vmatpush1.msra.mxu0 0.0
    %429 = vmatprep.subr.mxu0 0.0
    %430 = vmatpush1.msra.mxu0 0.0
    %431 = vmatprep.subr.mxu0 0.0
    %432 = vmatpush1.msra.mxu0 0.0
    %433 = vmatprep.subr.mxu0 0.0
    %434 = vmatpush1.msra.mxu0 0.0
    %435 = vmatprep.subr.mxu0 0.0
    %436 = vmatpush1.msra.mxu0 0.0
    %437 = vmatprep.subr.mxu0 0.0
    %438 = vmatpush1.msra.mxu0 0.0
    %439 = vmatprep.subr.mxu0 0.0
    %440 = vmatpush1.msra.mxu0 0.0
    %441 = vmatprep.subr.mxu0 0.0
    %442 = vmatpush1.msra.mxu0 0.0
    %443 = vmatprep.subr.mxu0 0.0
    %444 = vmatpush1.msra.mxu0 0.0
    %445 = vmatprep.subr.mxu0 0.0
    %446 = vmatpush1.msra.mxu0 0.0
    %447 = vmatprep.subr.mxu0 0.0
    %448 = vmatpush1.msra.mxu0 0.0
    %449 = vmatprep.subr.mxu0 0.0
    %450 = vmatpush1.msra.mxu0 0.0
    %451 = vmatprep.subr.mxu0 0.0
    %452 = vmatpush1.msra.mxu0 0.0
    %453 = vmatprep.subr.mxu0 0.0
    %454 = vmatpush1.msra.mxu0 0.0
    %455 = vmatprep.subr.mxu0 0.0
    %456 = vmatpush1.msra.mxu0 0.0
    %457 = vmatprep.subr.mxu0 0.0
    %458 = vmatpush1.msra.mxu0 0.0
    %459 = vmatprep.subr.mxu0 0.0
    %460 = vmatpush1.msra.mxu0 0.0
    %461 = vmatprep.subr.mxu0 0.0
    %462 = vmatpush1.msra.mxu0 0.0
    %463 = vmatprep.subr.mxu0 0.0
    %464 = vmatpush1.msra.mxu0 0.0
    %465 = vmatprep.mubr.f32.mxu0 0.0
    %466 = vmatmul.mubr.f32.gmra.mrb[0].mxu0 %v399
    %v467 = vpop.f32.mrb[0].mxu0
    %v468 = vadd.f32 0.0, %v467
    %v469 = vpop.f32.mrb[0].mxu0
    %470 = vdwg.mxu0
    %vm471 = vcmask 516096
    %472 = vst.msk [vmem:[#allocation7] sm:$0x1] %vm471, %v395
    %473 = vst.msk [vmem:[#allocation7 + $0x1] sm:$0x1] %vm471, %v468
    // Predicated region
    $region22: #{attention_pallas.1} parent=1 // pred_check
      _
    $region23: #{attention_pallas.1} parent=1 // pred_check_branch
      %475 = sbr.rel (0) target = $region25
    $region24: #{attention_pallas.1} parent=1 // pred_region
      %s477 = ssub.s32 32, 32
      %478 = vsyncadd [#allocation4], %s477
      %s479 = sshll.u32 [#allocation7], 4
      %s480 = int_to_ptr.vmem [resolvable:$true] %s479
      %485 = dma.vmem_to_hbm [thread:$0]  %s480, 32, %s3, [#allocation4], 16, 16, 1
    $region25: #{attention_pallas.1} parent=1 // pred_fallthru
      _
    // Predicated region
    $region26: #{attention_pallas.1} parent=1 // pred_check
      _
    $region27: #{attention_pallas.1} parent=1 // pred_check_branch
      %487 = sbr.rel (0) target = $region29
    $region28: #{attention_pallas.1} parent=1 // pred_region
      %488 = dma.done [#allocation4], 32
    $region29: #{attention_pallas.1} parent=1 // pred_fallthru
      _
    %489 = vsyncpa [#allocation3], 1
    %490 = vsyncpa [#allocation6], 1
    %491 = vsyncpa [#allocation4], 1

</llo_original>
